<compile_context>
chip_gen: v7x
topology: tpu7x:2x2x1
jax: 0.10.0
libtpu: 0.0.40
codegen_flags: <defaults>
</compile_context>

<pallas_src>
import functools

import jax
import jax.numpy as jnp
from jax import lax
from jax.experimental import pallas as pl
from jax.experimental.pallas import tpu as pltpu


# ----------------------------------------------------------------------------
# Generation-aware VMEM budgeting / tile pickers
# ----------------------------------------------------------------------------
def _vmem_capacity_bytes():
    try:
        return int(getattr(pltpu.get_tpu_info(), "vmem_capacity_bytes", 128 << 20))
    except Exception:
        return 128 << 20


def _pick_hw_tile(HW, C, max_block_bytes):
    """Largest pixel tile that divides HW, is a multiple of 128 and keeps one
    double-buffered (C, tile) bf16 input block under max_block_bytes."""
    bytes_per_col = 2 * 2 * C          # bf16, double buffered
    if bytes_per_col * HW <= max_block_bytes or HW % 128 != 0:
        return HW
    tile = HW
    while (tile % 2 == 0 and (tile // 2) % 128 == 0
           and bytes_per_col * tile > max_block_bytes):
        tile //= 2
    return tile


def _pick_c_tile(C, HW, max_block_bytes):
    """Largest channel tile (multiple of 8, dividing C) whose stage-3 working
    set (bf16 input + f32 output, double buffered) fits max_block_bytes."""
    bytes_per_row = (2 + 4) * 2 * HW   # bf16 in + f32 out, double buffered
    c_tile = C
    while (c_tile % 2 == 0 and (c_tile // 2) % 8 == 0
           and bytes_per_row * c_tile > max_block_bytes):
        c_tile //= 2
    return c_tile


# ----------------------------------------------------------------------------
# Kernel 1 (fused): Gram-matrix channel score + filter-generating MLP,
# transposed (lane-dense-in-C) layout, per-batch output.
#   f_b^T = w1 @ relu( LN( w0 @ sigmoid(wk G_b wv^T / T) + b0 ) )     (kk, C)
# Grid: (B, n_hw).  b is "parallel" (megacore), the pixel axis is the
# "arbitrary" reduction into a per-batch (C, C) Gram scratch.
# ----------------------------------------------------------------------------
def _score_filters_kernel(x_ref, wk_ref, wv_ref, w0_ref, b0_ref, lnwT_ref,
                          lnbT_ref, w1_ref, f_ref, g_ref,
                          *, temperature, eps):
    t = pl.program_id(1)

    @pl.when(t == 0)
    def _init_gram():
        g_ref[...] = jnp.zeros_like(g_ref)

    # Accumulate the Gram matrix over the (tiled) pixel axis (bf16 MXU,
    # f32 accumulation).
    x = x_ref[0]                                                  # (C, hw_tile)
    g_ref[...] += lax.dot_general(x, x, (((1,), (1,)), ((), ())),
                                  preferred_element_type=jnp.float32)

    @pl.when(t == pl.num_programs(1) - 1)
    def _per_batch_mlp():
        G = g_ref[...]                                            # (C, C), symmetric
        # score^T = wk @ G @ wv^T   (== (wv G wk^T)^T since G = G^T)
        sT = jnp.dot(wk_ref[...], G, preferred_element_type=jnp.float32)
        sT = lax.dot_general(sT, wv_ref[...], (((1,), (1,)), ((), ())),
                             preferred_element_type=jnp.float32)  # (C, C)
        sT = jax.nn.sigmoid(sT * (1.0 / temperature))
        # linear0 in transposed layout: (hid, C)
        f0 = jnp.dot(w0_ref[...], sT, preferred_element_type=jnp.float32)
        f0 = f0 + b0_ref[...]                                     # b0 as (hid, 1)
        # LayerNorm over the whole (C, hid) slab — centered two-pass variance.
        mu = jnp.mean(f0)
        d = f0 - mu
        var = jnp.mean(d * d)
        f0 = d * lax.rsqrt(var + eps)
        f0 = f0 * lnwT_ref[...] + lnbT_ref[...]
        f0 = jnp.maximum(f0, 0.0)                                 # ReLU
        # linear1 (batch mean and b1 are applied in the wrapper): (kk, C)
        f_ref[0] = jnp.dot(w1_ref[...], f0, preferred_element_type=jnp.float32)


# ----------------------------------------------------------------------------
# Kernel 2: depthwise conv2d with the generated per-channel filter on a
# lane-dense (C_tile, H*W) layout.  Factored shifts: k column rolls (masked
# once), then one row roll per row offset -> 2(k-1) rolls total.
# ----------------------------------------------------------------------------
def _dwconv_kernel(filt_ref, bias_ref, mask_ref, x_ref, o_ref, *, ksize, W, HW):
    pad = ksize // 2
    x = x_ref[0].astype(jnp.float32)                              # (Ct, HW)

    # Column-shifted, column-masked copies of x (k-1 nontrivial XLU rolls).
    cols = []
    for v in range(ksize):
        dv = v - pad
        if dv == 0:
            cols.append(x)
        else:
            xv = pltpu.roll(x, (-dv) % HW, axis=1)
            cols.append(xv * mask_ref[v:v + 1, :])                # col-validity

    # Accumulate directly into the output VMEM block (bounds live vregs).
    o_ref[0] = jnp.broadcast_to(bias_ref[...], x.shape)           # conv bias
    for u in range(ksize):
        du = u - pad
        part = cols[0] * filt_ref[:, u * ksize:u * ksize + 1]
        for v in range(1, ksize):
            part = part + cols[v] * filt_ref[:, u * ksize + v:u * ksize + v + 1]
        if du != 0:
            part = pltpu.roll(part, (-du * W) % HW, axis=1)
            part = part * mask_ref[ksize + u:ksize + u + 1, :]    # row-validity
        o_ref[0] = o_ref[0] + part
    # TODO(synk): for very large H*W, tile the pixel axis here with a pad*W
    # halo (and/or fuse stage 3 into the stage-1 pallas_call when x fits VMEM
    # to avoid the second HBM read of x).


# ----------------------------------------------------------------------------
# Wrapper
# ----------------------------------------------------------------------------
def gcconv3_forward(x, params, *, kernel_size, temperature=1.0, eps=1e-5):
    B, C, H, W = x.shape
    HW = H * W
    k = kernel_size
    kk = k * k
    pad = k // 2

    wk, wv, w0, b0, lnw, lnb, w1, b1, bias = params
    hid = w0.shape[0]

    # Generation-aware VMEM budgets (v5e/v6e: 128 MiB physical, v7x: 64 MiB).
    vmem_cap = _vmem_capacity_bytes()
    vmem_limit = vmem_cap // 2                 # above the 16/32 MiB scoped default
    hw_budget = vmem_cap // 8                  # 16 MiB (v5e/v6e) / 8 MiB (v7x)
    c_budget = vmem_cap // 8

    # x streamed once in bf16 (halves HBM read bytes for both kernels; MXU is
    # bf16-native).  Elementwise math in stage 3 is done in f32 after upcast.
    x3 = x.reshape(B, C, HW).astype(jnp.bfloat16)

    # ---- fused stage 1 + 2: Gram score -> MLP -> per-batch filters ---------
    hw_tile = _pick_hw_tile(HW, C, hw_budget)
    n_hw = HW // hw_tile
    filters_kkC = pl.pallas_call(
        functools.partial(_score_filters_kernel, temperature=temperature, eps=eps),
        out_shape=jax.ShapeDtypeStruct((B, kk, C), jnp.float32),
        grid=(B, n_hw),
        in_specs=[
            pl.BlockSpec((1, C, hw_tile), lambda b, t: (b, 0, t)),   # x (bf16)
            pl.BlockSpec((C, C), lambda b, t: (0, 0)),               # wk
            pl.BlockSpec((C, C), lambda b, t: (0, 0)),               # wv
            pl.BlockSpec((hid, C), lambda b, t: (0, 0)),             # w0
            pl.BlockSpec((hid, 1), lambda b, t: (0, 0)),             # b0
            pl.BlockSpec((hid, C), lambda b, t: (0, 0)),             # ln weight^T
            pl.BlockSpec((hid, C), lambda b, t: (0, 0)),             # ln bias^T
            pl.BlockSpec((kk, hid), lambda b, t: (0, 0)),            # w1
        ],
        out_specs=pl.BlockSpec((1, kk, C), lambda b, t: (b, 0, 0)),
        scratch_shapes=[pltpu.VMEM((C, C), jnp.float32)],            # Gram acc
        compiler_params=pltpu.CompilerParams(
            dimension_semantics=("parallel", "arbitrary"),
            vmem_limit_bytes=vmem_limit),
    )(x3, wk, wv, w0, b0.reshape(hid, 1), lnw.T, lnb.T, w1)

    # Batch mean + linear1 bias (trivial XLA reduction), then (C, kk) layout
    # for the depthwise conv.
    filters = (jnp.mean(filters_kkC, axis=0) + b1[:, None]).T       # (C, kk)

    # ---- stage 3: depthwise conv on lane-dense (C_tile, H*W) blocks --------
    # Precomputed edge-validity masks: rows 0..k-1 column masks, k..2k-1 row
    # masks (constant block, never rebuilt per grid step).
    pix = jnp.arange(HW)
    row = pix // W
    col = pix % W
    col_masks = [((col + (v - pad) >= 0) & (col + (v - pad) < W)) for v in range(k)]
    row_masks = [((row + (u - pad) >= 0) & (row + (u - pad) < H)) for u in range(k)]
    masks = jnp.stack(col_masks + row_masks).astype(jnp.float32)    # (2k, HW)

    c_tile = _pick_c_tile(C, HW, c_budget)
    out_flat = pl.pallas_call(
        functools.partial(_dwconv_kernel, ksize=k, W=W, HW=HW),
        out_shape=jax.ShapeDtypeStruct((B, C, HW), jnp.float32),
        grid=(C // c_tile, B),                                      # c outer, b inner
        in_specs=[
            pl.BlockSpec((c_tile, kk), lambda c, b: (c, 0)),        # filters
            pl.BlockSpec((c_tile, 1), lambda c, b: (c, 0)),         # conv bias
            pl.BlockSpec((2 * k, HW), lambda c, b: (0, 0)),         # edge masks
            pl.BlockSpec((1, c_tile, HW), lambda c, b: (b, c, 0)),  # x (bf16)
        ],
        out_specs=pl.BlockSpec((1, c_tile, HW), lambda c, b: (b, c, 0)),
        compiler_params=pltpu.CompilerParams(
            dimension_semantics=("parallel", "parallel"),
            vmem_limit_bytes=vmem_limit),
    )(filters, bias.reshape(C, 1), masks, x3)

    return out_flat.reshape(B, C, H, W)


# ----------------------------------------------------------------------------
# Pure-JAX reference (mirrors the PyTorch module semantics, high precision)
# ----------------------------------------------------------------------------
def gcconv3_reference(x, params, *, kernel_size, temperature=1.0, eps=1e-5):
    wk, wv, w0, b0, lnw, lnb, w1, b1, bias = params
    B, C, H, W = x.shape
    k = kernel_size
    pad = k // 2
    hp = lax.Precision.HIGHEST
    x3 = x.reshape(B, C, H * W)
    V = jnp.einsum('oi,bip->bop', wv, x3, precision=hp)        # (B, C, HW)
    K = jnp.einsum('oi,bip->bpo', wk, x3, precision=hp)        # (B, HW, C)
    s = jax.nn.sigmoid(jnp.einsum('bcp,bpd->bcd', V, K, precision=hp) / temperature)
    f = jnp.einsum('bcd,hd->bch', s, w0, precision=hp) + b0    # (B, C, hid)
    mu = f.mean(axis=(1, 2), keepdims=True)
    var = ((f - mu) ** 2).mean(axis=(1, 2), keepdims=True)
    f = (f - mu) / jnp.sqrt(var + eps) * lnw + lnb
    f = jnp.maximum(f, 0.0)
    f = jnp.einsum('bch,kh->bck', f, w1, precision=hp) + b1    # (B, C, k*k)
    filt = f.mean(axis=0).reshape(C, k, k)
    xp = jnp.pad(x, ((0, 0), (0, 0), (pad, pad), (pad, pad)))
    out = jnp.zeros_like(x)
    for u in range(k):
        for v in range(k):
            out = out + filt[:, u, v][None, :, None, None] * \
                xp[:, :, u:u + H, v:v + W]
    return out + bias[None, :, None, None]


if __name__ == "__main__":
    B, C, H, W = 2, 8, 16, 16
    kernel_size, reduction, temperature = 3, 4, 1.0
    hid = C // reduction
    kk = kernel_size * kernel_size

    key = jax.random.PRNGKey(0)
    keys = jax.random.split(key, 10)
    x = jax.random.normal(keys[0], (B, C, H, W), dtype=jnp.float32)

    # Deterministic synthetic parameters (shapes match the PyTorch module).
    wk = 0.1 * jax.random.normal(keys[1], (C, C), dtype=jnp.float32)     # key 1x1 conv
    wv = 0.1 * jax.random.normal(keys[2], (C, C), dtype=jnp.float32)     # value 1x1 conv
    w0 = 0.2 * jax.random.normal(keys[3], (hid, C), dtype=jnp.float32)   # linear0 (out,in)
    b0 = 0.1 * jax.random.normal(keys[4], (hid,), dtype=jnp.float32)
    lnw = 1.0 + 0.1 * jax.random.normal(keys[5], (C, hid), dtype=jnp.float32)
    lnb = 0.1 * jax.random.normal(keys[6], (C, hid), dtype=jnp.float32)
    w1 = 0.2 * jax.random.normal(keys[7], (kk, hid), dtype=jnp.float32)  # linear1 (out,in)
    b1 = 0.1 * jax.random.normal(keys[8], (kk,), dtype=jnp.float32)
    bias = 0.01 * jax.random.normal(keys[9], (C,), dtype=jnp.float32)    # conv bias

    params = (wk, wv, w0, b0, lnw, lnb, w1, b1, bias)

    out = gcconv3_forward(x, params, kernel_size=kernel_size,
                          temperature=temperature)
    out = jax.block_until_ready(out)

    ref = gcconv3_reference(x, params, kernel_size=kernel_size,
                            temperature=temperature)
    ref = jax.block_until_ready(ref)

    assert out.shape == (B, C, H, W)
    assert jnp.allclose(out, ref, rtol=3e-2, atol=3e-2), \
        f"max abs diff {jnp.max(jnp.abs(out - ref))}"

    print("KERNEL_OK")
</pallas_src>

<mosaic_0001>
module attributes {stable_mosaic.version = 11 : i64} {
  func.func @_score_filters_kernel(%arg0: i32, %arg1: i32, %arg2: memref<1x8x256xbf16, #tpu.memory_space<vmem>>, %arg3: memref<8x8xf32, #tpu.memory_space<vmem>>, %arg4: memref<8x8xf32, #tpu.memory_space<vmem>>, %arg5: memref<2x8xf32, #tpu.memory_space<vmem>>, %arg6: memref<2x1xf32, #tpu.memory_space<vmem>>, %arg7: memref<2x8xf32, #tpu.memory_space<vmem>>, %arg8: memref<2x8xf32, #tpu.memory_space<vmem>>, %arg9: memref<9x2xf32, #tpu.memory_space<vmem>>, %arg10: memref<1x9x8xf32, #tpu.memory_space<vmem>>, %arg11: memref<8x8xf32, #tpu.memory_space<vmem>>) attributes {dimension_semantics = [#tpu.dimension_semantics<parallel>, #tpu.dimension_semantics<arbitrary>], iteration_bounds = array<i64: 2, 1>, scalar_prefetch = 0 : i64, scratch_operands = 1 : i64, tpu.core_type = #tpu.core_type<tc>, window_params = [{transform_indices = @transform_0, window_bounds = array<i64: 1, 8, 256>}, {pipeline_mode = #tpu.pipeline_mode<synchronous>, transform_indices = @transform_1, window_bounds = array<i64: 8, 8>}, {pipeline_mode = #tpu.pipeline_mode<synchronous>, transform_indices = @transform_2, window_bounds = array<i64: 8, 8>}, {pipeline_mode = #tpu.pipeline_mode<synchronous>, transform_indices = @transform_3, window_bounds = array<i64: 2, 8>}, {pipeline_mode = #tpu.pipeline_mode<synchronous>, transform_indices = @transform_4, window_bounds = array<i64: 2, 1>}, {pipeline_mode = #tpu.pipeline_mode<synchronous>, transform_indices = @transform_5, window_bounds = array<i64: 2, 8>}, {pipeline_mode = #tpu.pipeline_mode<synchronous>, transform_indices = @transform_6, window_bounds = array<i64: 2, 8>}, {pipeline_mode = #tpu.pipeline_mode<synchronous>, transform_indices = @transform_7, window_bounds = array<i64: 9, 2>}, {transform_indices = @transform_8, window_bounds = array<i64: 1, 9, 8>}]} {
    %c0_i32 = arith.constant 0 : i32
    %0 = arith.cmpi eq, %arg1, %c0_i32 : i32
    %1 = arith.extui %0 : i1 to i32
    %c0_i32_0 = arith.constant 0 : i32
    %2 = arith.cmpi ne, %1, %c0_i32_0 : i32
    scf.if %2 {
      %cst_9 = arith.constant 0.000000e+00 : f32
      %12 = vector.broadcast %cst_9 : f32 to vector<8x8xf32>
      %c0_10 = arith.constant 0 : index
      %c0_11 = arith.constant 0 : index
      %13 = vector.load %arg11[%c0_10, %c0_11] : memref<8x8xf32, #tpu.memory_space<vmem>>, vector<8x8xf32>
      tpu.vector_store %arg11[%c0_10, %c0_11], %12 {strides = array<i32>} : memref<8x8xf32, #tpu.memory_space<vmem>>, vector<8x8xf32>,
    } else {
    }
    %c0 = arith.constant 0 : index
    %c0_1 = arith.constant 0 : index
    %c0_2 = arith.constant 0 : index
    %3 = vector.load %arg2[%c0, %c0_1, %c0_2] : memref<1x8x256xbf16, #tpu.memory_space<vmem>>, vector<1x8x256xbf16>
    %4 = vector.shape_cast %3 : vector<1x8x256xbf16> to vector<8x256xbf16>
    %c0_3 = arith.constant 0 : index
    %c0_4 = arith.constant 0 : index
    %5 = vector.load %arg11[%c0_3, %c0_4] : memref<8x8xf32, #tpu.memory_space<vmem>>, vector<8x8xf32>
    %cst = arith.constant dense<0.000000e+00> : vector<8x8xf32>
    %6 = tpu.matmul %4, %4, %cst {dimension_numbers = #tpu.dot_dimension_numbers<[1], [1], [0], [0], [0, 0, 1, 0], [], []>} : vector<8x256xbf16>, vector<8x256xbf16>, vector<8x8xf32> -> vector<8x8xf32>
    %7 = arith.addf %5, %6 : vector<8x8xf32>
    %c0_5 = arith.constant 0 : index
    %c0_6 = arith.constant 0 : index
    %8 = vector.load %arg11[%c0_5, %c0_6] : memref<8x8xf32, #tpu.memory_space<vmem>>, vector<8x8xf32>
    tpu.vector_store %arg11[%c0_5, %c0_6], %7 {strides = array<i32>} : memref<8x8xf32, #tpu.memory_space<vmem>>, vector<8x8xf32>,
    %c0_i32_7 = arith.constant 0 : i32
    %9 = arith.cmpi eq, %arg1, %c0_i32_7 : i32
    %10 = arith.extui %9 : i1 to i32
    %c0_i32_8 = arith.constant 0 : i32
    %11 = arith.cmpi ne, %10, %c0_i32_8 : i32
    scf.if %11 {
      %c0_9 = arith.constant 0 : index
      %c0_10 = arith.constant 0 : index
      %12 = vector.load %arg11[%c0_9, %c0_10] : memref<8x8xf32, #tpu.memory_space<vmem>>, vector<8x8xf32>
      %c0_11 = arith.constant 0 : index
      %c0_12 = arith.constant 0 : index
      %13 = vector.load %arg3[%c0_11, %c0_12] : memref<8x8xf32, #tpu.memory_space<vmem>>, vector<8x8xf32>
      %cst_13 = arith.constant dense<0.000000e+00> : vector<8x8xf32>
      %14 = tpu.matmul %13, %12, %cst_13 {dimension_numbers = #tpu.dot_dimension_numbers<[1], [0], [0], [1], [0, 0, 1, 1], [], []>} : vector<8x8xf32>, vector<8x8xf32>, vector<8x8xf32> -> vector<8x8xf32>
      %c0_14 = arith.constant 0 : index
      %c0_15 = arith.constant 0 : index
      %15 = vector.load %arg4[%c0_14, %c0_15] : memref<8x8xf32, #tpu.memory_space<vmem>>, vector<8x8xf32>
      %cst_16 = arith.constant dense<0.000000e+00> : vector<8x8xf32>
      %16 = tpu.matmul %14, %15, %cst_16 {dimension_numbers = #tpu.dot_dimension_numbers<[1], [1], [0], [0], [0, 0, 1, 0], [], []>} : vector<8x8xf32>, vector<8x8xf32>, vector<8x8xf32> -> vector<8x8xf32>
      %cst_17 = arith.constant 1.000000e+00 : f32
      %17 = vector.broadcast %cst_17 : f32 to vector<8x8xf32>
      %18 = arith.mulf %16, %17 : vector<8x8xf32>
      %19 = arith.negf %18 : vector<8x8xf32>
      %20 = math.exp %19 : vector<8x8xf32>
      %cst_18 = arith.constant 1.000000e+00 : f32
      %21 = vector.broadcast %cst_18 : f32 to vector<8x8xf32>
      %22 = arith.addf %21, %20 : vector<8x8xf32>
      %23 = arith.divf %21, %22 : vector<8x8xf32>
      %c0_19 = arith.constant 0 : index
      %c0_20 = arith.constant 0 : index
      %24 = vector.load %arg5[%c0_19, %c0_20] : memref<2x8xf32, #tpu.memory_space<vmem>>, vector<2x8xf32>
      %cst_21 = arith.constant dense<0.000000e+00> : vector<2x8xf32>
      %25 = tpu.matmul %24, %23, %cst_21 {dimension_numbers = #tpu.dot_dimension_numbers<[1], [0], [0], [1], [0, 0, 1, 1], [], []>} : vector<2x8xf32>, vector<8x8xf32>, vector<2x8xf32> -> vector<2x8xf32>
      %c0_22 = arith.constant 0 : index
      %c0_23 = arith.constant 0 : index
      %26 = vector.load %arg6[%c0_22, %c0_23] : memref<2x1xf32, #tpu.memory_space<vmem>>, vector<2x1xf32>
      %27 = vector.broadcast %26 : vector<2x1xf32> to vector<2x8xf32>
      %28 = arith.addf %25, %27 : vector<2x8xf32>
      %29 = vector.shape_cast %28 : vector<2x8xf32> to vector<1x2x8xf32>
      %cst_24 = arith.constant dense<0.000000e+00> : vector<1xf32>
      %30 = vector.multi_reduction <add>, %29, %cst_24 [1, 2] : vector<1x2x8xf32> to vector<1xf32>
      %31 = vector.shape_cast %30 : vector<1xf32> to vector<1x1x1xf32>
      %32 = vector.extract %31[0, 0, 0] : f32 from vector<1x1x1xf32>
      %cst_25 = arith.constant 1.600000e+01 : f32
      %33 = arith.divf %32, %cst_25 : f32
      %34 = vector.broadcast %33 : f32 to vector<2x8xf32>
      %35 = arith.subf %28, %34 : vector<2x8xf32>
      %36 = arith.mulf %35, %35 : vector<2x8xf32>
      %37 = vector.shape_cast %36 : vector<2x8xf32> to vector<1x2x8xf32>
      %cst_26 = arith.constant dense<0.000000e+00> : vector<1xf32>
      %38 = vector.multi_reduction <add>, %37, %cst_26 [1, 2] : vector<1x2x8xf32> to vector<1xf32>
      %39 = vector.shape_cast %38 : vector<1xf32> to vector<1x1x1xf32>
      %40 = vector.extract %39[0, 0, 0] : f32 from vector<1x1x1xf32>
      %cst_27 = arith.constant 1.600000e+01 : f32
      %41 = arith.divf %40, %cst_27 : f32
      %cst_28 = arith.constant 9.99999974E-6 : f32
      %42 = arith.addf %41, %cst_28 : f32
      %43 = math.rsqrt %42 : f32
      %44 = vector.broadcast %43 : f32 to vector<2x8xf32>
      %45 = arith.mulf %35, %44 : vector<2x8xf32>
      %c0_29 = arith.constant 0 : index
      %c0_30 = arith.constant 0 : index
      %46 = vector.load %arg7[%c0_29, %c0_30] : memref<2x8xf32, #tpu.memory_space<vmem>>, vector<2x8xf32>
      %47 = arith.mulf %45, %46 : vector<2x8xf32>
      %c0_31 = arith.constant 0 : index
      %c0_32 = arith.constant 0 : index
      %48 = vector.load %arg8[%c0_31, %c0_32] : memref<2x8xf32, #tpu.memory_space<vmem>>, vector<2x8xf32>
      %49 = arith.addf %47, %48 : vector<2x8xf32>
      %cst_33 = arith.constant 0.000000e+00 : f32
      %50 = vector.broadcast %cst_33 : f32 to vector<2x8xf32>
      %51 = arith.maximumf %49, %50 : vector<2x8xf32>
      %c0_34 = arith.constant 0 : index
      %c0_35 = arith.constant 0 : index
      %52 = vector.load %arg9[%c0_34, %c0_35] : memref<9x2xf32, #tpu.memory_space<vmem>>, vector<9x2xf32>
      %cst_36 = arith.constant dense<0.000000e+00> : vector<9x8xf32>
      %53 = tpu.matmul %52, %51, %cst_36 {dimension_numbers = #tpu.dot_dimension_numbers<[1], [0], [0], [1], [0, 0, 1, 1], [], []>} : vector<9x2xf32>, vector<2x8xf32>, vector<9x8xf32> -> vector<9x8xf32>
      %c0_37 = arith.constant 0 : index
      %c0_38 = arith.constant 0 : index
      %c0_39 = arith.constant 0 : index
      %54 = vector.load %arg10[%c0_37, %c0_38, %c0_39] : memref<1x9x8xf32, #tpu.memory_space<vmem>>, vector<1x9x8xf32>
      %55 = vector.shape_cast %54 : vector<1x9x8xf32> to vector<9x8xf32>
      %56 = vector.shape_cast %53 : vector<9x8xf32> to vector<1x9x8xf32>
      tpu.vector_store %arg10[%c0_37, %c0_38, %c0_39], %56 {strides = array<i32>} : memref<1x9x8xf32, #tpu.memory_space<vmem>>, vector<1x9x8xf32>,
    } else {
    }
    return
  }
  func.func @transform_0(%arg0: i32, %arg1: i32) -> (i32, i32, i32) {
    %c0_i32 = arith.constant 0 : i32
    %c0_i32_0 = arith.constant 0 : i32
    return %arg0, %c0_i32, %arg1 : i32, i32, i32
  }
  func.func @transform_1(%arg0: i32, %arg1: i32) -> (i32, i32) {
    %c0_i32 = arith.constant 0 : i32
    %c0_i32_0 = arith.constant 0 : i32
    %c0_i32_1 = arith.constant 0 : i32
    return %c0_i32, %c0_i32_0 : i32, i32
  }
  func.func @transform_2(%arg0: i32, %arg1: i32) -> (i32, i32) {
    %c0_i32 = arith.constant 0 : i32
    %c0_i32_0 = arith.constant 0 : i32
    %c0_i32_1 = arith.constant 0 : i32
    return %c0_i32, %c0_i32_0 : i32, i32
  }
  func.func @transform_3(%arg0: i32, %arg1: i32) -> (i32, i32) {
    %c0_i32 = arith.constant 0 : i32
    %c0_i32_0 = arith.constant 0 : i32
    %c0_i32_1 = arith.constant 0 : i32
    return %c0_i32, %c0_i32_0 : i32, i32
  }
  func.func @transform_4(%arg0: i32, %arg1: i32) -> (i32, i32) {
    %c0_i32 = arith.constant 0 : i32
    %c0_i32_0 = arith.constant 0 : i32
    %c0_i32_1 = arith.constant 0 : i32
    return %c0_i32, %c0_i32_0 : i32, i32
  }
  func.func @transform_5(%arg0: i32, %arg1: i32) -> (i32, i32) {
    %c0_i32 = arith.constant 0 : i32
    %c0_i32_0 = arith.constant 0 : i32
    %c0_i32_1 = arith.constant 0 : i32
    return %c0_i32, %c0_i32_0 : i32, i32
  }
  func.func @transform_6(%arg0: i32, %arg1: i32) -> (i32, i32) {
    %c0_i32 = arith.constant 0 : i32
    %c0_i32_0 = arith.constant 0 : i32
    %c0_i32_1 = arith.constant 0 : i32
    return %c0_i32, %c0_i32_0 : i32, i32
  }
  func.func @transform_7(%arg0: i32, %arg1: i32) -> (i32, i32) {
    %c0_i32 = arith.constant 0 : i32
    %c0_i32_0 = arith.constant 0 : i32
    %c0_i32_1 = arith.constant 0 : i32
    return %c0_i32, %c0_i32_0 : i32, i32
  }
  func.func @transform_8(%arg0: i32, %arg1: i32) -> (i32, i32, i32) {
    %c0_i32 = arith.constant 0 : i32
    %c0_i32_0 = arith.constant 0 : i32
    %c0_i32_1 = arith.constant 0 : i32
    return %arg0, %c0_i32, %c0_i32_0 : i32, i32, i32
  }
}

</mosaic_0001>

<llo_original>
// kernel: tpu_custom_call.1
$region0: #{tpu_custom_call.1}
  #allocation0 [shape = 'u32[]', space=smem, size = 0x4, offset = 0x4, fixed_abs, tag = 'smem constant byte address 0x4 - core index']
  #allocation1 [shape = 'u32[144,128]{1,0:T(1,128)}', space=vmem, size = 0x12000, scoped, tag = 'internal scratch']
  #allocation2 [shape = 'f32[8,8]{1,0:T(8,128)}', space=vmem, size = 0x1000, scoped, tag = 'scratch operand']
  %s0 = inlined_call_operand.hbm [shape: bf16[2,8,256], index: 0, kind: input, shape index: {}]
  %s1 = inlined_call_operand.hbm [shape: f32[8,8], index: 1, kind: input, shape index: {}]
  %s2 = inlined_call_operand.hbm [shape: f32[8,8], index: 2, kind: input, shape index: {}]
  %s3 = inlined_call_operand.hbm [shape: f32[2,8], index: 3, kind: input, shape index: {}]
  %s4 = inlined_call_operand.hbm [shape: f32[2,1], index: 4, kind: input, shape index: {}]
  %s5 = inlined_call_operand.hbm [shape: f32[2,8], index: 5, kind: input, shape index: {}]
  %s6 = inlined_call_operand.hbm [shape: f32[2,8], index: 6, kind: input, shape index: {}]
  %s7 = inlined_call_operand.hbm [shape: f32[9,2], index: 7, kind: input, shape index: {}]
  %s8 = inlined_call_operand.hbm [shape: f32[2,9,8], index: 8, kind: output, shape index: {}]
  %s9 = sld [smem:[#allocation0]]
  $region105: #{tpu_custom_call.1} parent=0
    _
  %s11 = ssub.s32 1, %s9
  %s12 = scalar_select 0, %s11, %s9
  $region1: #{tpu_custom_call.1} parent=0
    #allocation3 [shape = 'u8[8192]{0}', space=vmem, size = 0x2000, scoped, tag = 'input window, operand 0']
    #allocation4 [shape = 's32[2]{0}', space=sflag, size = 0x8, scoped, tag = 'scoped memory for tpu_custom_call.1']
    #allocation5 [shape = 's32[2]{0}', space=sflag, size = 0x8, scoped, tag = 'scoped memory for tpu_custom_call.1']
    #allocation6 [shape = 'u8[4096]{0}', space=vmem, size = 0x1000, scoped, tag = 'input window, operand 1, single buffered']
    #allocation7 [shape = 's32[1]{0}', space=sflag, size = 0x4, scoped, tag = 'scoped memory for tpu_custom_call.1']
    #allocation8 [shape = 'u8[4096]{0}', space=vmem, size = 0x1000, scoped, tag = 'input window, operand 2, single buffered']
    #allocation9 [shape = 'u8[1024]{0}', space=vmem, size = 0x400, scoped, tag = 'input window, operand 3, single buffered']
    #allocation10 [shape = 's32[1]{0}', space=sflag, size = 0x4, scoped, tag = 'scoped memory for tpu_custom_call.1']
    #allocation11 [shape = 'u8[1024]{0}', space=vmem, size = 0x400, scoped, tag = 'input window, operand 4, single buffered']
    #allocation12 [shape = 'u8[1024]{0}', space=vmem, size = 0x400, scoped, tag = 'input window, operand 5, single buffered']
    #allocation13 [shape = 's32[1]{0}', space=sflag, size = 0x4, scoped, tag = 'scoped memory for tpu_custom_call.1']
    #allocation14 [shape = 'u8[1024]{0}', space=vmem, size = 0x400, scoped, tag = 'input window, operand 6, single buffered']
    #allocation15 [shape = 'u8[8192]{0}', space=vmem, size = 0x2000, scoped, tag = 'input window, operand 7, single buffered']
    #allocation16 [shape = 's32[1]{0}', space=sflag, size = 0x4, scoped, tag = 'scoped memory for tpu_custom_call.1']
    #allocation17 [shape = 'u8[16384]{0}', space=vmem, size = 0x4000, scoped, tag = 'output window, operand 0']
    %13 = vsyncpa [#allocation4], 0
    %s14 = scalar_lea.sflag [#allocation4], 1
    %15 = vsyncpa %s14, 0
    %16 = vsyncpa [#allocation7], 0
    %17 = vsyncpa [#allocation10], 0
    %18 = vsyncpa [#allocation13], 0
    %19 = vsyncpa [#allocation16], 0
    %20 = vsyncpa [#allocation5], 0
    %s21 = scalar_lea.sflag [#allocation5], 1
    %22 = vsyncpa %s21, 0
    loop: start=0, step=1, limit=4
    $region2: #{tpu_custom_call.1} parent=1 // loop_pre_header
      _
    $region3: #{tpu_custom_call.1} parent=1 // loop_header
      %s24 = sphi 0, %s28
      %p25 = scmp.ge.s32.totalorder %s24, 4
      %s31 = sphi 0, %s43
      %s32 = sphi 0, %s39
      %s33 = sphi 0, %s31
      %s34 = sphi 0, %s32
      %s35 = sphi 0, %s33
      %s36 = sphi 0, %s34
      %s48 = sphi 0, %s50
      %s51 = sphi 0, %s48
      %s52 = sphi 0, %s51
      %s68 = sphi 0, %s52
      %s72 = sphi 0, %s72
      %s74 = sphi 0, %s72
      %s75 = sphi 0, %s74
      %s89 = sphi 0, %s75
      %s93 = sphi 0, %s93
      %s95 = sphi 0, %s93
      %s96 = sphi 0, %s95
      %s110 = sphi 0, %s96
      %s114 = sphi 0, %s114
      %s116 = sphi 0, %s114
      %s117 = sphi 0, %s116
      %s131 = sphi 0, %s117
      %s135 = sphi 0, %s135
      %s137 = sphi 0, %s135
      %s138 = sphi 0, %s137
      %s152 = sphi 0, %s138
      %s156 = sphi 0, %s156
      %s158 = sphi 0, %s156
      %s159 = sphi 0, %s158
      %s173 = sphi 0, %s159
      %s177 = sphi 0, %s177
      %s179 = sphi 0, %s177
      %s180 = sphi 0, %s179
      %s194 = sphi 0, %s180
      %s198 = sphi 0, %s198
      %s200 = sphi 0, %s198
      %s201 = sphi 0, %s200
      %s215 = sphi 0, %s201
      %s221 = sphi 0, %s223
      %s224 = sphi 0, %s221
      %s225 = sphi 0, %s224
      %s241 = sphi 0, %s225
    $region4: #{tpu_custom_call.1} parent=1 // loop_header_branch
      %27 = sbr.rel (%p25) target = $region8
    $region5: #{tpu_custom_call.1} parent=1 // loop_body
      %s29 = ssub.s32 %s24, 1
      %s30 = ssub.s32 %s24, 2
      %s37 = sadd.s32 1, %s32
      %p38 = scmp.ge.s32.totalorder %s37, 1
      %s39 = scalar_select %p38, 0, %s37
      %s40 = sadd.s32 1, %s31
      %s41 = scalar_select %p38, %s40, %s31
      %p42 = scmp.ge.s32.totalorder %s41, 2
      %s43 = scalar_select %p42, 0, %s41
      %s44 = ssub.s32 %s31, %s43
      %s45 = ssub.s32 %s32, %s39
      %s46 = sor.u32 %s44, %s45
      %p47 = scmp.eq.s32.totalorder %s46, 0
      %s49 = sadd.s32 %s48, 1
      %s50 = scalar_select %p47, %s48, %s49
      %p53 = pneg %p47
      %p54 = scmp.eq.s32.totalorder %s24, 1
      %p55 = por %p53, %p54
      %p56 = scmp.ne.s32.totalorder %s48, %s51
      %p57 = scmp.eq.s32.totalorder %s24, 0
      %p58 = por %p56, %p57
      %p59 = scmp.ne.s32.totalorder %s48, %s51
      %p60 = scmp.eq.s32.totalorder %s29, 1
      %p61 = por %p59, %p60
      %p62 = scmp.ne.s32.totalorder %s51, %s52
      %p63 = scmp.eq.s32.totalorder %s29, 0
      %p64 = por %p62, %p63
      %p65 = scmp.ne.s32.totalorder %s51, %s52
      %p66 = scmp.eq.s32.totalorder %s30, 1
      %p67 = por %p65, %p66
      %p69 = scmp.ne.s32.totalorder %s52, %s68
      %p70 = scmp.eq.s32.totalorder %s30, 0
      %p71 = por %p69, %p70
      %s73 = sadd.s32 %s72, 1
      %p76 = scmp.eq.s32.totalorder %s24, 1
      %p77 = scmp.ne.s32.totalorder %s72, %s74
      %p78 = scmp.eq.s32.totalorder %s24, 0
      %p79 = por %p77, %p78
      %p80 = scmp.ne.s32.totalorder %s72, %s74
      %p81 = scmp.eq.s32.totalorder %s29, 1
      %p82 = por %p80, %p81
      %p83 = scmp.ne.s32.totalorder %s74, %s75
      %p84 = scmp.eq.s32.totalorder %s29, 0
      %p85 = por %p83, %p84
      %p86 = scmp.ne.s32.totalorder %s74, %s75
      %p87 = scmp.eq.s32.totalorder %s30, 1
      %p88 = por %p86, %p87
      %p90 = scmp.ne.s32.totalorder %s75, %s89
      %p91 = scmp.eq.s32.totalorder %s30, 0
      %p92 = por %p90, %p91
      %s94 = sadd.s32 %s93, 1
      %p97 = scmp.eq.s32.totalorder %s24, 1
      %p98 = scmp.ne.s32.totalorder %s93, %s95
      %p99 = scmp.eq.s32.totalorder %s24, 0
      %p100 = por %p98, %p99
      %p101 = scmp.ne.s32.totalorder %s93, %s95
      %p102 = scmp.eq.s32.totalorder %s29, 1
      %p103 = por %p101, %p102
      %p104 = scmp.ne.s32.totalorder %s95, %s96
      %p105 = scmp.eq.s32.totalorder %s29, 0
      %p106 = por %p104, %p105
      %p107 = scmp.ne.s32.totalorder %s95, %s96
      %p108 = scmp.eq.s32.totalorder %s30, 1
      %p109 = por %p107, %p108
      %p111 = scmp.ne.s32.totalorder %s96, %s110
      %p112 = scmp.eq.s32.totalorder %s30, 0
      %p113 = por %p111, %p112
      %s115 = sadd.s32 %s114, 1
      %p118 = scmp.eq.s32.totalorder %s24, 1
      %p119 = scmp.ne.s32.totalorder %s114, %s116
      %p120 = scmp.eq.s32.totalorder %s24, 0
      %p121 = por %p119, %p120
      %p122 = scmp.ne.s32.totalorder %s114, %s116
      %p123 = scmp.eq.s32.totalorder %s29, 1
      %p124 = por %p122, %p123
      %p125 = scmp.ne.s32.totalorder %s116, %s117
      %p126 = scmp.eq.s32.totalorder %s29, 0
      %p127 = por %p125, %p126
      %p128 = scmp.ne.s32.totalorder %s116, %s117
      %p129 = scmp.eq.s32.totalorder %s30, 1
      %p130 = por %p128, %p129
      %p132 = scmp.ne.s32.totalorder %s117, %s131
      %p133 = scmp.eq.s32.totalorder %s30, 0
      %p134 = por %p132, %p133
      %s136 = sadd.s32 %s135, 1
      %p139 = scmp.eq.s32.totalorder %s24, 1
      %p140 = scmp.ne.s32.totalorder %s135, %s137
      %p141 = scmp.eq.s32.totalorder %s24, 0
      %p142 = por %p140, %p141
      %p143 = scmp.ne.s32.totalorder %s135, %s137
      %p144 = scmp.eq.s32.totalorder %s29, 1
      %p145 = por %p143, %p144
      %p146 = scmp.ne.s32.totalorder %s137, %s138
      %p147 = scmp.eq.s32.totalorder %s29, 0
      %p148 = por %p146, %p147
      %p149 = scmp.ne.s32.totalorder %s137, %s138
      %p150 = scmp.eq.s32.totalorder %s30, 1
      %p151 = por %p149, %p150
      %p153 = scmp.ne.s32.totalorder %s138, %s152
      %p154 = scmp.eq.s32.totalorder %s30, 0
      %p155 = por %p153, %p154
      %s157 = sadd.s32 %s156, 1
      %p160 = scmp.eq.s32.totalorder %s24, 1
      %p161 = scmp.ne.s32.totalorder %s156, %s158
      %p162 = scmp.eq.s32.totalorder %s24, 0
      %p163 = por %p161, %p162
      %p164 = scmp.ne.s32.totalorder %s156, %s158
      %p165 = scmp.eq.s32.totalorder %s29, 1
      %p166 = por %p164, %p165
      %p167 = scmp.ne.s32.totalorder %s158, %s159
      %p168 = scmp.eq.s32.totalorder %s29, 0
      %p169 = por %p167, %p168
      %p170 = scmp.ne.s32.totalorder %s158, %s159
      %p171 = scmp.eq.s32.totalorder %s30, 1
      %p172 = por %p170, %p171
      %p174 = scmp.ne.s32.totalorder %s159, %s173
      %p175 = scmp.eq.s32.totalorder %s30, 0
      %p176 = por %p174, %p175
      %s178 = sadd.s32 %s177, 1
      %p181 = scmp.eq.s32.totalorder %s24, 1
      %p182 = scmp.ne.s32.totalorder %s177, %s179
      %p183 = scmp.eq.s32.totalorder %s24, 0
      %p184 = por %p182, %p183
      %p185 = scmp.ne.s32.totalorder %s177, %s179
      %p186 = scmp.eq.s32.totalorder %s29, 1
      %p187 = por %p185, %p186
      %p188 = scmp.ne.s32.totalorder %s179, %s180
      %p189 = scmp.eq.s32.totalorder %s29, 0
      %p190 = por %p188, %p189
      %p191 = scmp.ne.s32.totalorder %s179, %s180
      %p192 = scmp.eq.s32.totalorder %s30, 1
      %p193 = por %p191, %p192
      %p195 = scmp.ne.s32.totalorder %s180, %s194
      %p196 = scmp.eq.s32.totalorder %s30, 0
      %p197 = por %p195, %p196
      %s199 = sadd.s32 %s198, 1
      %p202 = scmp.eq.s32.totalorder %s24, 1
      %p203 = scmp.ne.s32.totalorder %s198, %s200
      %p204 = scmp.eq.s32.totalorder %s24, 0
      %p205 = por %p203, %p204
      %p206 = scmp.ne.s32.totalorder %s198, %s200
      %p207 = scmp.eq.s32.totalorder %s29, 1
      %p208 = por %p206, %p207
      %p209 = scmp.ne.s32.totalorder %s200, %s201
      %p210 = scmp.eq.s32.totalorder %s29, 0
      %p211 = por %p209, %p210
      %p212 = scmp.ne.s32.totalorder %s200, %s201
      %p213 = scmp.eq.s32.totalorder %s30, 1
      %p214 = por %p212, %p213
      %p216 = scmp.ne.s32.totalorder %s201, %s215
      %p217 = scmp.eq.s32.totalorder %s30, 0
      %p218 = por %p216, %p217
      %s219 = ssub.s32 %s31, %s43
      %p220 = scmp.eq.s32.totalorder %s219, 0
      %s222 = sadd.s32 %s221, 1
      %s223 = scalar_select %p220, %s221, %s222
      %p226 = pneg %p220
      %p227 = scmp.eq.s32.totalorder %s24, 1
      %p228 = por %p226, %p227
      %p229 = scmp.ne.s32.totalorder %s221, %s224
      %p230 = scmp.eq.s32.totalorder %s24, 0
      %p231 = por %p229, %p230
      %p232 = scmp.ne.s32.totalorder %s221, %s224
      %p233 = scmp.eq.s32.totalorder %s29, 1
      %p234 = por %p232, %p233
      %p235 = scmp.ne.s32.totalorder %s224, %s225
      %p236 = scmp.eq.s32.totalorder %s29, 0
      %p237 = por %p235, %p236
      %p238 = scmp.ne.s32.totalorder %s224, %s225
      %p239 = scmp.eq.s32.totalorder %s30, 1
      %p240 = por %p238, %p239
      %p242 = scmp.ne.s32.totalorder %s225, %s241
      %p243 = scmp.eq.s32.totalorder %s30, 0
      %p244 = por %p242, %p243
      %p245 = scmp.le.s32.totalorder 1, %s24
      %p246 = scmp.lt.s32.totalorder %s24, 3
      %p247 = pnand %p245, %p246
      %p248 = pneg %p247
      // Predicated region
      $region9: #{tpu_custom_call.1} parent=5 // pred_check
        _
      $region10: #{tpu_custom_call.1} parent=5 // pred_check_branch
        %250 = sbr.rel (%p247) target = $region12
      $region11: #{tpu_custom_call.1} parent=5 // pred_region
        %s251 = ssub.s32 %s24, 1
        // Predicated region
        $region13: #{tpu_custom_call.1} parent=11 // pred_check
          %p252 = pneg %p85
        $region14: #{tpu_custom_call.1} parent=11 // pred_check_branch
          %254 = sbr.rel (%p252) target = $region16
        $region15: #{tpu_custom_call.1} parent=11 // pred_region
          %s256 = ssub.s32 128, 128
          %257 = vsyncadd [#allocation7], %s256
          %s259 = sshll.u32 [#allocation6], 4
          %s260 = int_to_ptr.vmem [resolvable:$true] %s259
          %262 = dma.hbm_to_vmem [thread:$0]  %s1, 128, %s260, [#allocation7]
        $region16: #{tpu_custom_call.1} parent=11 // pred_fallthru
          _
        // Predicated region
        $region17: #{tpu_custom_call.1} parent=11 // pred_check
          %p263 = pneg %p106
        $region18: #{tpu_custom_call.1} parent=11 // pred_check_branch
          %265 = sbr.rel (%p263) target = $region20
        $region19: #{tpu_custom_call.1} parent=11 // pred_region
          %s267 = ssub.s32 128, 128
          %268 = vsyncadd [#allocation7], %s267
          %s270 = sshll.u32 [#allocation8], 4
          %s271 = int_to_ptr.vmem [resolvable:$true] %s270
          %273 = dma.hbm_to_vmem [thread:$0]  %s2, 128, %s271, [#allocation7]
        $region20: #{tpu_custom_call.1} parent=11 // pred_fallthru
          _
        // Predicated region
        $region21: #{tpu_custom_call.1} parent=11 // pred_check
          %p274 = pneg %p127
        $region22: #{tpu_custom_call.1} parent=11 // pred_check_branch
          %276 = sbr.rel (%p274) target = $region24
        $region23: #{tpu_custom_call.1} parent=11 // pred_region
          %s278 = ssub.s32 32, 32
          %279 = vsyncadd [#allocation10], %s278
          %s281 = sshll.u32 [#allocation9], 4
          %s282 = int_to_ptr.vmem [resolvable:$true] %s281
          %284 = dma.hbm_to_vmem [thread:$0]  %s3, 32, %s282, [#allocation10]
        $region24: #{tpu_custom_call.1} parent=11 // pred_fallthru
          _
        // Predicated region
        $region25: #{tpu_custom_call.1} parent=11 // pred_check
          %p285 = pneg %p148
        $region26: #{tpu_custom_call.1} parent=11 // pred_check_branch
          %287 = sbr.rel (%p285) target = $region28
        $region27: #{tpu_custom_call.1} parent=11 // pred_region
          %s289 = ssub.s32 32, 32
          %290 = vsyncadd [#allocation10], %s289
          %s292 = sshll.u32 [#allocation11], 4
          %s293 = int_to_ptr.vmem [resolvable:$true] %s292
          %295 = dma.hbm_to_vmem [thread:$0]  %s4, 32, %s293, [#allocation10]
        $region28: #{tpu_custom_call.1} parent=11 // pred_fallthru
          _
        // Predicated region
        $region29: #{tpu_custom_call.1} parent=11 // pred_check
          %p296 = pneg %p169
        $region30: #{tpu_custom_call.1} parent=11 // pred_check_branch
          %298 = sbr.rel (%p296) target = $region32
        $region31: #{tpu_custom_call.1} parent=11 // pred_region
          %s300 = ssub.s32 32, 32
          %301 = vsyncadd [#allocation13], %s300
          %s303 = sshll.u32 [#allocation12], 4
          %s304 = int_to_ptr.vmem [resolvable:$true] %s303
          %306 = dma.hbm_to_vmem [thread:$0]  %s5, 32, %s304, [#allocation13]
        $region32: #{tpu_custom_call.1} parent=11 // pred_fallthru
          _
        // Predicated region
        $region33: #{tpu_custom_call.1} parent=11 // pred_check
          %p307 = pneg %p190
        $region34: #{tpu_custom_call.1} parent=11 // pred_check_branch
          %309 = sbr.rel (%p307) target = $region36
        $region35: #{tpu_custom_call.1} parent=11 // pred_region
          %s311 = ssub.s32 32, 32
          %312 = vsyncadd [#allocation13], %s311
          %s314 = sshll.u32 [#allocation14], 4
          %s315 = int_to_ptr.vmem [resolvable:$true] %s314
          %317 = dma.hbm_to_vmem [thread:$0]  %s6, 32, %s315, [#allocation13]
        $region36: #{tpu_custom_call.1} parent=11 // pred_fallthru
          _
        // Predicated region
        $region37: #{tpu_custom_call.1} parent=11 // pred_check
          %p318 = pneg %p211
        $region38: #{tpu_custom_call.1} parent=11 // pred_check_branch
          %320 = sbr.rel (%p318) target = $region40
        $region39: #{tpu_custom_call.1} parent=11 // pred_region
          %s322 = ssub.s32 256, 256
          %323 = vsyncadd [#allocation16], %s322
          %s324 = sshll.u32 [#allocation15], 4
          %s325 = int_to_ptr.vmem [resolvable:$true] %s324
          %330 = dma.hbm_to_vmem [thread:$0]  %s7, 256, %s325, [#allocation16], 128, 128, 8
        $region40: #{tpu_custom_call.1} parent=11 // pred_fallthru
          _
      $region12: #{tpu_custom_call.1} parent=5 // pred_fallthru
        _
      %p331 = scmp.lt.s32.totalorder %s24, 2
      // Predicated region
      $region41: #{tpu_custom_call.1} parent=5 // pred_check
        %p332 = pneg %p331
      $region42: #{tpu_custom_call.1} parent=5 // pred_check_branch
        %334 = sbr.rel (%p332) target = $region44
      $region43: #{tpu_custom_call.1} parent=5 // pred_region
        // Predicated region
        $region45: #{tpu_custom_call.1} parent=43 // pred_check
          %p335 = pneg %p58
        $region46: #{tpu_custom_call.1} parent=43 // pred_check_branch
          %337 = sbr.rel (%p335) target = $region48
        $region47: #{tpu_custom_call.1} parent=43 // pred_region
          %s338 = sand.u32 %s48, 1
          %s339 = scalar_lea.sflag [#allocation4], %s338
          %s340 = sand.u32 %s48, 1
          %s341 = smul.addr %s340, 8
          %s342 = scalar_lea.vmem [#allocation3], %s341
          %s343 = smul.u32 2, %s32
          %s345 = ssub.s32 128, 128
          %346 = vsyncadd %s339, %s345
          %s347 = smul.addr %s31, 2
          %s348 = sadd.s32 %s343, %s347
          %s349 = smul.addr %s348, 64
          %s350 = scalar_lea.hbm %s0, %s349
          %s352 = sshll.u32 %s342, 4
          %s353 = int_to_ptr.vmem [resolvable:$true] %s352
          %355 = dma.hbm_to_vmem [thread:$0]  %s350, 128, %s353, %s339
        $region48: #{tpu_custom_call.1} parent=43 // pred_fallthru
          _
      $region44: #{tpu_custom_call.1} parent=5 // pred_fallthru
        _
      %p356 = scmp.le.s32.totalorder 1, %s24
      %p357 = scmp.lt.s32.totalorder %s24, 3
      %p358 = pnand %p356, %p357
      %p359 = pneg %p358
      // Predicated region
      $region49: #{tpu_custom_call.1} parent=5 // pred_check
        _
      $region50: #{tpu_custom_call.1} parent=5 // pred_check_branch
        %361 = sbr.rel (%p358) target = $region52
      $region51: #{tpu_custom_call.1} parent=5 // pred_region
        %s362 = ssub.s32 %s24, 1
        %s363 = sand.u32 %s51, 1
        %s364 = scalar_lea.sflag [#allocation4], %s363
        %s365 = sand.u32 %s51, 1
        %s366 = smul.addr %s365, 8
        %s367 = scalar_lea.vmem [#allocation3], %s366
        // Predicated region
        $region53: #{tpu_custom_call.1} parent=51 // pred_check
          %p368 = pneg %p64
        $region54: #{tpu_custom_call.1} parent=51 // pred_check_branch
          %370 = sbr.rel (%p368) target = $region56
        $region55: #{tpu_custom_call.1} parent=51 // pred_region
          %371 = dma.done %s364, 128
        $region56: #{tpu_custom_call.1} parent=51 // pred_fallthru
          _
        // Predicated region
        $region57: #{tpu_custom_call.1} parent=51 // pred_check
          %p372 = pneg %p85
        $region58: #{tpu_custom_call.1} parent=51 // pred_check_branch
          %374 = sbr.rel (%p372) target = $region60
        $region59: #{tpu_custom_call.1} parent=51 // pred_region
          %375 = dma.done [#allocation7], 128
        $region60: #{tpu_custom_call.1} parent=51 // pred_fallthru
          _
        // Predicated region
        $region61: #{tpu_custom_call.1} parent=51 // pred_check
          %p376 = pneg %p106
        $region62: #{tpu_custom_call.1} parent=51 // pred_check_branch
          %378 = sbr.rel (%p376) target = $region64
        $region63: #{tpu_custom_call.1} parent=51 // pred_region
          %379 = dma.done [#allocation7], 128
        $region64: #{tpu_custom_call.1} parent=51 // pred_fallthru
          _
        // Predicated region
        $region65: #{tpu_custom_call.1} parent=51 // pred_check
          %p380 = pneg %p127
        $region66: #{tpu_custom_call.1} parent=51 // pred_check_branch
          %382 = sbr.rel (%p380) target = $region68
        $region67: #{tpu_custom_call.1} parent=51 // pred_region
          %383 = dma.done [#allocation10], 32
        $region68: #{tpu_custom_call.1} parent=51 // pred_fallthru
          _
        // Predicated region
        $region69: #{tpu_custom_call.1} parent=51 // pred_check
          %p384 = pneg %p148
        $region70: #{tpu_custom_call.1} parent=51 // pred_check_branch
          %386 = sbr.rel (%p384) target = $region72
        $region71: #{tpu_custom_call.1} parent=51 // pred_region
          %387 = dma.done [#allocation10], 32
        $region72: #{tpu_custom_call.1} parent=51 // pred_fallthru
          _
        // Predicated region
        $region73: #{tpu_custom_call.1} parent=51 // pred_check
          %p388 = pneg %p169
        $region74: #{tpu_custom_call.1} parent=51 // pred_check_branch
          %390 = sbr.rel (%p388) target = $region76
        $region75: #{tpu_custom_call.1} parent=51 // pred_region
          %391 = dma.done [#allocation13], 32
        $region76: #{tpu_custom_call.1} parent=51 // pred_fallthru
          _
        // Predicated region
        $region77: #{tpu_custom_call.1} parent=51 // pred_check
          %p392 = pneg %p190
        $region78: #{tpu_custom_call.1} parent=51 // pred_check_branch
          %394 = sbr.rel (%p392) target = $region80
        $region79: #{tpu_custom_call.1} parent=51 // pred_region
          %395 = dma.done [#allocation13], 32
        $region80: #{tpu_custom_call.1} parent=51 // pred_fallthru
          _
        // Predicated region
        $region81: #{tpu_custom_call.1} parent=51 // pred_check
          %p396 = pneg %p211
        $region82: #{tpu_custom_call.1} parent=51 // pred_check_branch
          %398 = sbr.rel (%p396) target = $region84
        $region83: #{tpu_custom_call.1} parent=51 // pred_region
          %399 = dma.done [#allocation16], 256
        $region84: #{tpu_custom_call.1} parent=51 // pred_fallthru
          _
        %s400 = sand.u32 %s51, 1
        %s401 = scalar_lea.sflag [#allocation4], %s400
        %s402 = sand.u32 %s51, 1
        %s403 = smul.addr %s402, 8
        %s404 = scalar_lea.vmem [#allocation3], %s403
        %p405 = pneg %p64
        %p406 = pneg %p61
        %p407 = pneg %p85
        %p408 = pneg %p82
        %p409 = pneg %p106
        %p410 = pneg %p103
        %p411 = pneg %p127
        %p412 = pneg %p124
        %p413 = pneg %p148
        %p414 = pneg %p145
        %p415 = pneg %p169
        %p416 = pneg %p166
        %p417 = pneg %p190
        %p418 = pneg %p187
        %p419 = pneg %p211
        %p420 = pneg %p208
        %p421 = pneg %p237
        %p422 = pneg %p234
        %s423 = sand.u32 %s224, 1
        %s424 = scalar_lea.sflag [#allocation5], %s423
        %s425 = sand.u32 %s224, 1
        %s426 = smul.addr %s425, 16
        %s427 = scalar_lea.vmem [#allocation17], %s426
        %s428 = smul.u32 2, %s34
        %p430 = scmp.eq.s32.totalorder %s34, 0
        // Predicated region
        $region85: #{tpu_custom_call.1} parent=51 // pred_check
          %p431 = pneg %p430
        $region86: #{tpu_custom_call.1} parent=51 // pred_check_branch
          %433 = sbr.rel (%p431) target = $region88
        $region87: #{tpu_custom_call.1} parent=51 // pred_region
          %vm434 = vcmask 64512
          %435 = vst.msk [vmem:[#allocation2] sm:$0xff] %vm434, 0.0
        $region88: #{tpu_custom_call.1} parent=51 // pred_fallthru
          _
        %v436 = vld [vmem:[%s367] sm:$0xff]
        %v437 = vld [vmem:[#allocation2] sm:$0xff]
        %v439 = vunpack.c.l.b16 %v436
        %v440 = vunpack.c.h.b16 %v436
        %v441 = vpack.c.b16 %v439, %v439
        %v442 = vpack.c.b16 %v440, %v440
        %445 = vmatprep.subr.bf16.mxu0 %v442
        %446 = vmatpush1.bf16.xpose.msra.mxu0 %v441
        %447 = vmatprep.subr.bf16.mxu0 0
        %448 = vmatpush1.bf16.xpose.msra.mxu0 0
        %449 = vmatprep.subr.bf16.mxu0 0
        %450 = vmatpush1.bf16.xpose.msra.mxu0 0
        %451 = vmatprep.subr.bf16.mxu0 0
        %452 = vmatpush1.bf16.xpose.msra.mxu0 0
        %453 = vmatprep.subr.bf16.mxu0 0
        %454 = vmatpush1.bf16.xpose.msra.mxu0 0
        %455 = vmatprep.subr.bf16.mxu0 0
        %456 = vmatpush1.bf16.xpose.msra.mxu0 0
        %457 = vmatprep.subr.bf16.mxu0 0
        %458 = vmatpush1.bf16.xpose.msra.mxu0 0
        %459 = vmatprep.subr.bf16.mxu0 0
        %460 = vmatpush1.bf16.xpose.msra.mxu0 0
        %461 = vmatprep.subr.bf16.mxu0 0
        %462 = vmatpush1.bf16.xpose.msra.mxu0 0
        %463 = vmatprep.subr.bf16.mxu0 0
        %464 = vmatpush1.bf16.xpose.msra.mxu0 0
        %465 = vmatprep.subr.bf16.mxu0 0
        %466 = vmatpush1.bf16.xpose.msra.mxu0 0
        %467 = vmatprep.subr.bf16.mxu0 0
        %468 = vmatpush1.bf16.xpose.msra.mxu0 0
        %469 = vmatprep.subr.bf16.mxu0 0
        %470 = vmatpush1.bf16.xpose.msra.mxu0 0
        %471 = vmatprep.subr.bf16.mxu0 0
        %472 = vmatpush1.bf16.xpose.msra.mxu0 0
        %473 = vmatprep.subr.bf16.mxu0 0
        %474 = vmatpush1.bf16.xpose.msra.mxu0 0
        %475 = vmatprep.subr.bf16.mxu0 0
        %476 = vmatpush1.bf16.xpose.msra.mxu0 0
        %477 = vmatprep.mubr.bf16.mxu0 %v442
        %478 = vmatmul.mubr.bf16.gmra.mrb[0].mxu0 %v441
        %v479 = vpop.f32.mrb[0].mxu0
        %v480 = vadd.f32 0.0, %v479
        %v481 = vpop.f32.mrb[0].mxu0
        %v482 = vpop.f32.mrb[0].mxu0
        %v483 = vpop.f32.mrb[0].mxu0
        %484 = vdwg.mxu0
        %v485 = vadd.f32 %v437, %v480
        %vm486 = vcmask 64512
        %487 = vst.msk [vmem:[#allocation2] sm:$0xff] %vm486, %v485
        // Predicated region
        $region89: #{tpu_custom_call.1} parent=51 // pred_check
          %p488 = pneg %p430
        $region90: #{tpu_custom_call.1} parent=51 // pred_check_branch
          %490 = sbr.rel (%p488) target = $region92
        $region91: #{tpu_custom_call.1} parent=51 // pred_region
          %v491 = vld [vmem:[#allocation2] sm:$0xff]
          %v492 = vld [vmem:[#allocation6] sm:$0xff]
          %v494 = vsel %vm486, %v492, 0
          %496 = vmatprep.subr.mxu0 0.0
          %497 = vmatpush1.msra.mxu0 %v491
          %498 = vmatprep.subr.mxu0 0.0
          %499 = vmatpush1.msra.mxu0 0.0
          %500 = vmatprep.subr.mxu0 0.0
          %501 = vmatpush1.msra.mxu0 0.0
          %502 = vmatprep.subr.mxu0 0.0
          %503 = vmatpush1.msra.mxu0 0.0
          %504 = vmatprep.subr.mxu0 0.0
          %505 = vmatpush1.msra.mxu0 0.0
          %506 = vmatprep.subr.mxu0 0.0
          %507 = vmatpush1.msra.mxu0 0.0
          %508 = vmatprep.subr.mxu0 0.0
          %509 = vmatpush1.msra.mxu0 0.0
          %510 = vmatprep.subr.mxu0 0.0
          %511 = vmatpush1.msra.mxu0 0.0
          %512 = vmatprep.subr.mxu0 0.0
          %513 = vmatpush1.msra.mxu0 0.0
          %514 = vmatprep.subr.mxu0 0.0
          %515 = vmatpush1.msra.mxu0 0.0
          %516 = vmatprep.subr.mxu0 0.0
          %517 = vmatpush1.msra.mxu0 0.0
          %518 = vmatprep.subr.mxu0 0.0
          %519 = vmatpush1.msra.mxu0 0.0
          %520 = vmatprep.subr.mxu0 0.0
          %521 = vmatpush1.msra.mxu0 0.0
          %522 = vmatprep.subr.mxu0 0.0
          %523 = vmatpush1.msra.mxu0 0.0
          %524 = vmatprep.subr.mxu0 0.0
          %525 = vmatpush1.msra.mxu0 0.0
          %526 = vmatprep.subr.mxu0 0.0
          %527 = vmatpush1.msra.mxu0 0.0
          %528 = vmatprep.subr.mxu0 0.0
          %529 = vmatpush1.msra.mxu0 0.0
          %530 = vmatprep.subr.mxu0 0.0
          %531 = vmatpush1.msra.mxu0 0.0
          %532 = vmatprep.subr.mxu0 0.0
          %533 = vmatpush1.msra.mxu0 0.0
          %534 = vmatprep.subr.mxu0 0.0
          %535 = vmatpush1.msra.mxu0 0.0
          %536 = vmatprep.subr.mxu0 0.0
          %537 = vmatpush1.msra.mxu0 0.0
          %538 = vmatprep.subr.mxu0 0.0
          %539 = vmatpush1.msra.mxu0 0.0
          %540 = vmatprep.subr.mxu0 0.0
          %541 = vmatpush1.msra.mxu0 0.0
          %542 = vmatprep.subr.mxu0 0.0
          %543 = vmatpush1.msra.mxu0 0.0
          %544 = vmatprep.subr.mxu0 0.0
          %545 = vmatpush1.msra.mxu0 0.0
          %546 = vmatprep.subr.mxu0 0.0
          %547 = vmatpush1.msra.mxu0 0.0
          %548 = vmatprep.subr.mxu0 0.0
          %549 = vmatpush1.msra.mxu0 0.0
          %550 = vmatprep.subr.mxu0 0.0
          %551 = vmatpush1.msra.mxu0 0.0
          %552 = vmatprep.subr.mxu0 0.0
          %553 = vmatpush1.msra.mxu0 0.0
          %554 = vmatprep.subr.mxu0 0.0
          %555 = vmatpush1.msra.mxu0 0.0
          %556 = vmatprep.subr.mxu0 0.0
          %557 = vmatpush1.msra.mxu0 0.0
          %558 = vmatprep.subr.mxu0 0.0
          %559 = vmatpush1.msra.mxu0 0.0
          %560 = vmatprep.mubr.f32.mxu0 0.0
          %561 = vmatmul.mubr.f32.gmra.mrb[0].mxu0 %v494
          %v562 = vpop.f32.mrb[0].mxu0
          %v563 = vadd.f32 0.0, %v562
          %v564 = vpop.f32.mrb[0].mxu0
          %565 = vdwg.mxu0
          %v566 = vld [vmem:[#allocation8] sm:$0xff]
          %v568 = vsel %vm486, %v563, 0
          %v571 = vsel %vm486, %v566, 0
          %573 = vmatprep.subr.mxu0 0.0
          %574 = vmatpush1.xpose.msra.mxu0 %v571
          %575 = vmatprep.subr.mxu0 0.0
          %576 = vmatpush1.xpose.msra.mxu0 0.0
          %577 = vmatprep.subr.mxu0 0.0
          %578 = vmatpush1.xpose.msra.mxu0 0.0
          %579 = vmatprep.subr.mxu0 0.0
          %580 = vmatpush1.xpose.msra.mxu0 0.0
          %581 = vmatprep.subr.mxu0 0.0
          %582 = vmatpush1.xpose.msra.mxu0 0.0
          %583 = vmatprep.subr.mxu0 0.0
          %584 = vmatpush1.xpose.msra.mxu0 0.0
          %585 = vmatprep.subr.mxu0 0.0
          %586 = vmatpush1.xpose.msra.mxu0 0.0
          %587 = vmatprep.subr.mxu0 0.0
          %588 = vmatpush1.xpose.msra.mxu0 0.0
          %589 = vmatprep.subr.mxu0 0.0
          %590 = vmatpush1.xpose.msra.mxu0 0.0
          %591 = vmatprep.subr.mxu0 0.0
          %592 = vmatpush1.xpose.msra.mxu0 0.0
          %593 = vmatprep.subr.mxu0 0.0
          %594 = vmatpush1.xpose.msra.mxu0 0.0
          %595 = vmatprep.subr.mxu0 0.0
          %596 = vmatpush1.xpose.msra.mxu0 0.0
          %597 = vmatprep.subr.mxu0 0.0
          %598 = vmatpush1.xpose.msra.mxu0 0.0
          %599 = vmatprep.subr.mxu0 0.0
          %600 = vmatpush1.xpose.msra.mxu0 0.0
          %601 = vmatprep.subr.mxu0 0.0
          %602 = vmatpush1.xpose.msra.mxu0 0.0
          %603 = vmatprep.subr.mxu0 0.0
          %604 = vmatpush1.xpose.msra.mxu0 0.0
          %605 = vmatprep.subr.mxu0 0.0
          %606 = vmatpush1.xpose.msra.mxu0 0.0
          %607 = vmatprep.subr.mxu0 0.0
          %608 = vmatpush1.xpose.msra.mxu0 0.0
          %609 = vmatprep.subr.mxu0 0.0
          %610 = vmatpush1.xpose.msra.mxu0 0.0
          %611 = vmatprep.subr.mxu0 0.0
          %612 = vmatpush1.xpose.msra.mxu0 0.0
          %613 = vmatprep.subr.mxu0 0.0
          %614 = vmatpush1.xpose.msra.mxu0 0.0
          %615 = vmatprep.subr.mxu0 0.0
          %616 = vmatpush1.xpose.msra.mxu0 0.0
          %617 = vmatprep.subr.mxu0 0.0
          %618 = vmatpush1.xpose.msra.mxu0 0.0
          %619 = vmatprep.subr.mxu0 0.0
          %620 = vmatpush1.xpose.msra.mxu0 0.0
          %621 = vmatprep.subr.mxu0 0.0
          %622 = vmatpush1.xpose.msra.mxu0 0.0
          %623 = vmatprep.subr.mxu0 0.0
          %624 = vmatpush1.xpose.msra.mxu0 0.0
          %625 = vmatprep.subr.mxu0 0.0
          %626 = vmatpush1.xpose.msra.mxu0 0.0
          %627 = vmatprep.subr.mxu0 0.0
          %628 = vmatpush1.xpose.msra.mxu0 0.0
          %629 = vmatprep.subr.mxu0 0.0
          %630 = vmatpush1.xpose.msra.mxu0 0.0
          %631 = vmatprep.subr.mxu0 0.0
          %632 = vmatpush1.xpose.msra.mxu0 0.0
          %633 = vmatprep.subr.mxu0 0.0
          %634 = vmatpush1.xpose.msra.mxu0 0.0
          %635 = vmatprep.subr.mxu0 0.0
          %636 = vmatpush1.xpose.msra.mxu0 0.0
          %637 = vmatprep.mubr.f32.mxu0 0.0
          %638 = vmatmul.mubr.f32.gmra.mrb[0].mxu0 %v568
          %v639 = vpop.f32.mrb[0].mxu0
          %v640 = vadd.f32 0.0, %v639
          %v641 = vpop.f32.mrb[0].mxu0
          %642 = vdwg.mxu0
          %v643 = vxor.u32 %v640, 2147483648
          %v644 = vmul.f32 %v643, 1.442695
          %v645 = vpow.pop %v644
          %v646 = vadd.f32 %v645, 1.0
          %v647 = vrcp.pop %v646
          %v648 = vmul.f32 1.0, %v647
          %v649 = vld [vmem:[#allocation9] sm:$0x3]
          %v650 = vld [vmem:[#allocation11] sm:$0x3]
          %652 = vset.pattern.permute.xlu0 0
          %653 = vperm.xlu0 %652, %v650
          %v654 = vpop.permute.xlu0 %653
          %v657 = vsel %vm486, %v649, 0
          %659 = vmatprep.subr.mxu0 0.0
          %660 = vmatpush1.msra.mxu0 %v648
          %661 = vmatprep.subr.mxu0 0.0
          %662 = vmatpush1.msra.mxu0 0.0
          %663 = vmatprep.subr.mxu0 0.0
          %664 = vmatpush1.msra.mxu0 0.0
          %665 = vmatprep.subr.mxu0 0.0
          %666 = vmatpush1.msra.mxu0 0.0
          %667 = vmatprep.subr.mxu0 0.0
          %668 = vmatpush1.msra.mxu0 0.0
          %669 = vmatprep.subr.mxu0 0.0
          %670 = vmatpush1.msra.mxu0 0.0
          %671 = vmatprep.subr.mxu0 0.0
          %672 = vmatpush1.msra.mxu0 0.0
          %673 = vmatprep.subr.mxu0 0.0
          %674 = vmatpush1.msra.mxu0 0.0
          %675 = vmatprep.subr.mxu0 0.0
          %676 = vmatpush1.msra.mxu0 0.0
          %677 = vmatprep.subr.mxu0 0.0
          %678 = vmatpush1.msra.mxu0 0.0
          %679 = vmatprep.subr.mxu0 0.0
          %680 = vmatpush1.msra.mxu0 0.0
          %681 = vmatprep.subr.mxu0 0.0
          %682 = vmatpush1.msra.mxu0 0.0
          %683 = vmatprep.subr.mxu0 0.0
          %684 = vmatpush1.msra.mxu0 0.0
          %685 = vmatprep.subr.mxu0 0.0
          %686 = vmatpush1.msra.mxu0 0.0
          %687 = vmatprep.subr.mxu0 0.0
          %688 = vmatpush1.msra.mxu0 0.0
          %689 = vmatprep.subr.mxu0 0.0
          %690 = vmatpush1.msra.mxu0 0.0
          %691 = vmatprep.subr.mxu0 0.0
          %692 = vmatpush1.msra.mxu0 0.0
          %693 = vmatprep.subr.mxu0 0.0
          %694 = vmatpush1.msra.mxu0 0.0
          %695 = vmatprep.subr.mxu0 0.0
          %696 = vmatpush1.msra.mxu0 0.0
          %697 = vmatprep.subr.mxu0 0.0
          %698 = vmatpush1.msra.mxu0 0.0
          %699 = vmatprep.subr.mxu0 0.0
          %700 = vmatpush1.msra.mxu0 0.0
          %701 = vmatprep.subr.mxu0 0.0
          %702 = vmatpush1.msra.mxu0 0.0
          %703 = vmatprep.subr.mxu0 0.0
          %704 = vmatpush1.msra.mxu0 0.0
          %705 = vmatprep.subr.mxu0 0.0
          %706 = vmatpush1.msra.mxu0 0.0
          %707 = vmatprep.subr.mxu0 0.0
          %708 = vmatpush1.msra.mxu0 0.0
          %709 = vmatprep.subr.mxu0 0.0
          %710 = vmatpush1.msra.mxu0 0.0
          %711 = vmatprep.subr.mxu0 0.0
          %712 = vmatpush1.msra.mxu0 0.0
          %713 = vmatprep.subr.mxu0 0.0
          %714 = vmatpush1.msra.mxu0 0.0
          %715 = vmatprep.subr.mxu0 0.0
          %716 = vmatpush1.msra.mxu0 0.0
          %717 = vmatprep.subr.mxu0 0.0
          %718 = vmatpush1.msra.mxu0 0.0
          %719 = vmatprep.subr.mxu0 0.0
          %720 = vmatpush1.msra.mxu0 0.0
          %721 = vmatprep.subr.mxu0 0.0
          %722 = vmatpush1.msra.mxu0 0.0
          %723 = vmatprep.mubr.f32.mxu0 0.0
          %724 = vmatmul.mubr.f32.gmra.mrb[0].mxu0 %v657
          %v725 = vpop.f32.mrb[0].mxu0
          %v726 = vadd.f32 %v654, %v725
          %v727 = vpop.f32.mrb[0].mxu0
          %728 = vdwg.mxu0
          %vm729 = vcmask 58368
          %v730 = vsel %vm729, %v726, 0.0
          %731 = vadd.xlane.f32.xlu0 %v730
          %v732 = vpop.xlane.xlu0 %731
          %v733 = vrot.slane %v732, 4
          %v734 = vadd.f32 %v732, %v733
          %v735 = vrot.slane %v734, 2
          %v736 = vadd.f32 %v734, %v735
          %v737 = vrot.slane %v736, 1
          %v738 = vadd.f32 %v736, %v737
          %s739 = vtos %v738
          %v740 = vrcp.pop 16.0
          %s741 = vtos %v740
          %s742 = smul.f32 %s739, %s741
          %v743 = vstv %s742
          %v744 = vsub.f32 %v726, %v743
          %v745 = vmul.f32 %v744, %v744
          %v746 = vsel %vm729, %v745, 0.0
          %747 = vadd.xlane.f32.xlu0 %v746
          %v748 = vpop.xlane.xlu0 %747
          %v749 = vrot.slane %v748, 4
          %v750 = vadd.f32 %v748, %v749
          %v751 = vrot.slane %v750, 2
          %v752 = vadd.f32 %v750, %v751
          %v753 = vrot.slane %v752, 1
          %v754 = vadd.f32 %v752, %v753
          %s755 = vtos %v754
          %v756 = vrcp.pop 16.0
          %s757 = vtos %v756
          %s758 = smul.f32 %s755, %s757
          %s759 = sadd.f32 %s758, 1e-05
          %v760 = vstv %s759
          %v761 = vrsqrt.pop %v760
          %s762 = vtos %v761
          %v763 = vstv %s762
          %v764 = vmul.f32 %v744, %v763
          %v765 = vld [vmem:[#allocation12] sm:$0x3]
          %v766 = vmul.f32 %v764, %v765
          %v767 = vld [vmem:[#allocation14] sm:$0x3]
          %v768 = vadd.f32 %v766, %v767
          %v769 = vmax.f32 %v768, 0.0
          %v770 = vld [vmem:[#allocation15] sm:$0xff]
          %v771 = vld [vmem:[#allocation15 + $0x8] sm:$0x1]
          %vm772 = vcmask 15360
          %v774 = vsel %vm772, %v770, 0
          %v777 = vsel %vm772, %v771, 0
          %vm779 = vcmask 1041408
          %v781 = vsel %vm779, %v769, 0
          %783 = vmatprep.subr.mxu0 0.0
          %784 = vmatpush1.msra.mxu0 %v781
          %785 = vmatprep.subr.mxu0 0.0
          %786 = vmatpush1.msra.mxu0 0.0
          %787 = vmatprep.subr.mxu0 0.0
          %788 = vmatpush1.msra.mxu0 0.0
          %789 = vmatprep.subr.mxu0 0.0
          %790 = vmatpush1.msra.mxu0 0.0
          %791 = vmatprep.subr.mxu0 0.0
          %792 = vmatpush1.msra.mxu0 0.0
          %793 = vmatprep.subr.mxu0 0.0
          %794 = vmatpush1.msra.mxu0 0.0
          %795 = vmatprep.subr.mxu0 0.0
          %796 = vmatpush1.msra.mxu0 0.0
          %797 = vmatprep.subr.mxu0 0.0
          %798 = vmatpush1.msra.mxu0 0.0
          %799 = vmatprep.subr.mxu0 0.0
          %800 = vmatpush1.msra.mxu0 0.0
          %801 = vmatprep.subr.mxu0 0.0
          %802 = vmatpush1.msra.mxu0 0.0
          %803 = vmatprep.subr.mxu0 0.0
          %804 = vmatpush1.msra.mxu0 0.0
          %805 = vmatprep.subr.mxu0 0.0
          %806 = vmatpush1.msra.mxu0 0.0
          %807 = vmatprep.subr.mxu0 0.0
          %808 = vmatpush1.msra.mxu0 0.0
          %809 = vmatprep.subr.mxu0 0.0
          %810 = vmatpush1.msra.mxu0 0.0
          %811 = vmatprep.subr.mxu0 0.0
          %812 = vmatpush1.msra.mxu0 0.0
          %813 = vmatprep.subr.mxu0 0.0
          %814 = vmatpush1.msra.mxu0 0.0
          %815 = vmatprep.subr.mxu0 0.0
          %816 = vmatpush1.msra.mxu0 0.0
          %817 = vmatprep.subr.mxu0 0.0
          %818 = vmatpush1.msra.mxu0 0.0
          %819 = vmatprep.subr.mxu0 0.0
          %820 = vmatpush1.msra.mxu0 0.0
          %821 = vmatprep.subr.mxu0 0.0
          %822 = vmatpush1.msra.mxu0 0.0
          %823 = vmatprep.subr.mxu0 0.0
          %824 = vmatpush1.msra.mxu0 0.0
          %825 = vmatprep.subr.mxu0 0.0
          %826 = vmatpush1.msra.mxu0 0.0
          %827 = vmatprep.subr.mxu0 0.0
          %828 = vmatpush1.msra.mxu0 0.0
          %829 = vmatprep.subr.mxu0 0.0
          %830 = vmatpush1.msra.mxu0 0.0
          %831 = vmatprep.subr.mxu0 0.0
          %832 = vmatpush1.msra.mxu0 0.0
          %833 = vmatprep.subr.mxu0 0.0
          %834 = vmatpush1.msra.mxu0 0.0
          %835 = vmatprep.subr.mxu0 0.0
          %836 = vmatpush1.msra.mxu0 0.0
          %837 = vmatprep.subr.mxu0 0.0
          %838 = vmatpush1.msra.mxu0 0.0
          %839 = vmatprep.subr.mxu0 0.0
          %840 = vmatpush1.msra.mxu0 0.0
          %841 = vmatprep.subr.mxu0 0.0
          %842 = vmatpush1.msra.mxu0 0.0
          %843 = vmatprep.subr.mxu0 0.0
          %844 = vmatpush1.msra.mxu0 0.0
          %845 = vmatprep.subr.mxu0 0.0
          %846 = vmatpush1.msra.mxu0 0.0
          %847 = vmatprep.mubr.f32.mxu0 0.0
          %848 = vmatmul.mubr.f32.gmra.mrb[0].mxu0 %v774
          %v849 = vpop.f32.mrb[0].mxu0
          %v850 = vadd.f32 0.0, %v849
          %v851 = vpop.f32.mrb[0].mxu0
          %852 = vmatprep.mubr.f32.mxu0 0.0
          %853 = vmatmul.mubr.f32.gmra.mrb[0].mxu0 %v777
          %v854 = vpop.f32.mrb[0].mxu0
          %v855 = vadd.f32 0.0, %v854
          %v856 = vpop.f32.mrb[0].mxu0
          %857 = vdwg.mxu0
          %858 = vst.msk [vmem:[%s427] sm:$0xff] %vm486, %v850
          %vm859 = vcmask 57344
          %860 = vst.msk [vmem:[%s427 + $0x8] sm:$0x1] %vm859, %v855
        $region92: #{tpu_custom_call.1} parent=51 // pred_fallthru
          _
        %s861 = sand.u32 %s224, 1
        %s862 = scalar_lea.sflag [#allocation5], %s861
        %s863 = sand.u32 %s224, 1
        %s864 = smul.addr %s863, 16
        %s865 = scalar_lea.vmem [#allocation17], %s864
        // Predicated region
        $region93: #{tpu_custom_call.1} parent=51 // pred_check
          %p866 = pneg %p234
        $region94: #{tpu_custom_call.1} parent=51 // pred_check_branch
          %868 = sbr.rel (%p866) target = $region96
        $region95: #{tpu_custom_call.1} parent=51 // pred_region
          %s870 = ssub.s32 256, 256
          %871 = vsyncadd %s862, %s870
          %s872 = smul.addr %s33, 2
          %s873 = smul.addr %s872, 128
          %s874 = scalar_lea.hbm %s8, %s873
          %s875 = sshll.u32 %s865, 4
          %s876 = int_to_ptr.vmem [resolvable:$true] %s875
          %881 = dma.vmem_to_hbm [thread:$0]  %s876, 256, %s874, %s862, 128, 128, 8
        $region96: #{tpu_custom_call.1} parent=51 // pred_fallthru
          _
      $region52: #{tpu_custom_call.1} parent=5 // pred_fallthru
        _
      %p882 = scmp.le.s32.totalorder 2, %s24
      // Predicated region
      $region97: #{tpu_custom_call.1} parent=5 // pred_check
        %p883 = pneg %p882
      $region98: #{tpu_custom_call.1} parent=5 // pred_check_branch
        %885 = sbr.rel (%p883) target = $region100
      $region99: #{tpu_custom_call.1} parent=5 // pred_region
        %s886 = ssub.s32 %s24, 2
        // Predicated region
        $region101: #{tpu_custom_call.1} parent=99 // pred_check
          %p887 = pneg %p240
        $region102: #{tpu_custom_call.1} parent=99 // pred_check_branch
          %889 = sbr.rel (%p887) target = $region104
        $region103: #{tpu_custom_call.1} parent=99 // pred_region
          %s890 = sand.u32 %s225, 1
          %s891 = scalar_lea.sflag [#allocation5], %s890
          %s892 = sand.u32 %s225, 1
          %s893 = smul.addr %s892, 16
          %s894 = scalar_lea.vmem [#allocation17], %s893
          %895 = dma.done %s891, 256
        $region104: #{tpu_custom_call.1} parent=99 // pred_fallthru
          _
      $region100: #{tpu_custom_call.1} parent=5 // pred_fallthru
        _
    $region6: #{tpu_custom_call.1} parent=1 // loop_footer
      %s28 = sadd.s32 1, %s24
    $region7: #{tpu_custom_call.1} parent=1 // loop_footer_branch
      %23 = sbr.rel target = $region3
    $region8: #{tpu_custom_call.1} parent=1 // loop_exit
      _
    %896 = vsyncpa [#allocation4], 1
    %s897 = scalar_lea.sflag [#allocation4], 1
    %898 = vsyncpa %s897, 1
    %899 = vsyncpa [#allocation7], 1
    %900 = vsyncpa [#allocation10], 1
    %901 = vsyncpa [#allocation13], 1
    %902 = vsyncpa [#allocation16], 1
    %903 = vsyncpa [#allocation5], 1
    %s904 = scalar_lea.sflag [#allocation5], 1
    %905 = vsyncpa %s904, 1

</llo_original>
